<compile_context>
chip_gen: v5e
topology: v5e:2x2
jax: 0.10.0
libtpu: 0.0.40
codegen_flags: <defaults>
</compile_context>

<pallas_src>
import jax
import jax.numpy as jnp
from jax.experimental import pallas as pl
from jax.experimental.pallas import tpu as pltpu


def _sigmoid_kernel(x_ref, o_ref):
    # x_ref / o_ref : (block_rows, lane_width)
    x = x_ref[...].astype(jnp.float32)
    # Numerically stable, branchless sigmoid:
    #   sigmoid(x) = 1/(1+e^-x)   if x >= 0
    #              = e^x/(1+e^x)  if x <  0
    # The exp argument is always <= 0, so no overflow (padded garbage in a
    # partial last block cannot fault either; its results are masked away).
    z = jnp.exp(-jnp.abs(x))                      # EUP
    inv = pl.reciprocal(1.0 + z)                  # exact reciprocal (DMA-bound kernel)
    y = jnp.where(x >= 0, inv, z * inv)
    o_ref[...] = y.astype(o_ref.dtype)


def _round_up(a, b):
    return ((a + b - 1) // b) * b


_LANE_CANDIDATES = (1024, 512, 256, 128)   # lane-dense widths (multiples of 128)
_MAX_BLOCK_ELEMS = 512 * 1024              # ~2 MiB per f32 block (x4 double-buffered)
_TARGET_STEPS = 8                          # keep both v7x TensorCores busy
_SUBLANE_MULT = 32                         # tile-safe rows for f32 / bf16 / int8


def bound_sigmoid_forward(x, *, min_pallas_elems=65536, force_pallas=False):
    """Elementwise sigmoid over an arbitrarily-shaped array via Pallas."""
    orig_shape = x.shape
    orig_dtype = x.dtype
    total = x.size

    if total == 0:
        return jax.nn.sigmoid(x)
    if total < min_pallas_elems and not force_pallas:
        # Tiny activations: launch + DMA-setup overhead dominates; XLA's fused
        # elementwise sigmoid is as fast or faster.
        return jax.nn.sigmoid(x)

    # Pick a lane width that divides the element count so that the flatten /
    # reshape is a free bitcast (no pad, no slice copy).  Prefer widths that
    # also give >= 8 rows.
    lane_width = None
    for w in _LANE_CANDIDATES:
        if total % w == 0 and total // w >= 8:
            lane_width = w
            break
    if lane_width is None:
        for w in _LANE_CANDIDATES:
            if total % w == 0:
                lane_width = w
                break

    xf = jnp.ravel(x)  # free for contiguous arrays
    if lane_width is not None:
        rows = total // lane_width
        padded = False
    else:
        # Ragged size: pad only up to the next lane multiple (< 512 extra elems).
        lane_width = 512
        rows = pl.cdiv(total, lane_width)
        xf = jnp.pad(xf, (0, rows * lane_width - total))
        padded = True

    x2 = xf.reshape(rows, lane_width)

    # Block sizing: big (~2 MiB f32) blocks amortize per-step overhead, but keep
    # roughly _TARGET_STEPS grid steps so the "parallel" axis shards across
    # v7x's two TensorCores.  Ragged last block is a Pallas partial block.
    block_rows = _round_up(pl.cdiv(rows, _TARGET_STEPS), _SUBLANE_MULT)
    block_rows = min(block_rows, max(_MAX_BLOCK_ELEMS // lane_width, _SUBLANE_MULT))
    grid = (pl.cdiv(rows, block_rows),)

    out2 = pl.pallas_call(
        _sigmoid_kernel,
        out_shape=jax.ShapeDtypeStruct((rows, lane_width), orig_dtype),
        grid_spec=pltpu.PrefetchScalarGridSpec(
            num_scalar_prefetch=0,
            grid=grid,
            in_specs=[pl.BlockSpec((block_rows, lane_width), lambda i: (i, 0))],
            out_specs=pl.BlockSpec((block_rows, lane_width), lambda i: (i, 0)),
        ),
        compiler_params=pltpu.CompilerParams(
            dimension_semantics=("parallel",),
            vmem_limit_bytes=32 * 1024 * 1024,
        ),
    )(x2)

    if padded:
        return out2.reshape(-1)[:total].reshape(orig_shape)
    return out2.reshape(orig_shape)


def bound_sigmoid_interval_propagate(h_L, h_U, **kwargs):
    """interval_propagate: sigmoid is monotone, apply forward to both bounds."""
    return bound_sigmoid_forward(h_L, **kwargs), bound_sigmoid_forward(h_U, **kwargs)


if __name__ == "__main__":
    key = jax.random.PRNGKey(0)

    # Small activation shape consistent with the module (N, C, H, W).
    x_small = jax.random.normal(key, (2, 4, 16, 16), dtype=jnp.float32) * 4.0
    ref_small = jax.nn.sigmoid(x_small)

    # Force the Pallas path on the small shape so the kernel itself runs.
    out = jax.block_until_ready(bound_sigmoid_forward(x_small, force_pallas=True))
    assert out.shape == ref_small.shape
    assert jnp.allclose(out, ref_small, atol=1e-6, rtol=1e-6)

    # Default path for tiny inputs (fallback to fused XLA sigmoid).
    out_fb = jax.block_until_ready(bound_sigmoid_forward(x_small))
    assert jnp.allclose(out_fb, ref_small, atol=1e-6, rtol=1e-6)

    # Larger, lane-divisible shape: no pad / no slice copies around the kernel.
    k1, k2 = jax.random.split(key)
    x_big = jax.random.normal(k1, (4, 8, 64, 64), dtype=jnp.float32) * 4.0
    out_big = jax.block_until_ready(bound_sigmoid_forward(x_big))
    assert jnp.allclose(out_big, jax.nn.sigmoid(x_big), atol=1e-6, rtol=1e-6)

    # Ragged shape (element count not a multiple of 128): minimal-pad path.
    x_rag = jax.random.normal(k2, (3, 5, 41, 37), dtype=jnp.float32) * 4.0
    out_rag = jax.block_until_ready(bound_sigmoid_forward(x_rag, force_pallas=True))
    assert jnp.allclose(out_rag, jax.nn.sigmoid(x_rag), atol=1e-6, rtol=1e-6)

    # interval_propagate: forward applied to lower/upper bounds.
    lo, hi = bound_sigmoid_interval_propagate(
        x_small - 0.5, x_small + 0.5, force_pallas=True)
    lo, hi = jax.block_until_ready((lo, hi))
    assert jnp.allclose(lo, jax.nn.sigmoid(x_small - 0.5), atol=1e-6, rtol=1e-6)
    assert jnp.allclose(hi, jax.nn.sigmoid(x_small + 0.5), atol=1e-6, rtol=1e-6)

    print("KERNEL_OK")
</pallas_src>

<mosaic_0001>
module attributes {stable_mosaic.version = 11 : i64} {
  func.func @_sigmoid_kernel(%arg0: i32, %arg1: memref<32x256xf32, #tpu.memory_space<vmem>>, %arg2: memref<32x256xf32, #tpu.memory_space<vmem>>) attributes {dimension_semantics = [#tpu.dimension_semantics<parallel>], iteration_bounds = array<i64: 1>, scalar_prefetch = 0 : i64, scratch_operands = 0 : i64, tpu.core_type = #tpu.core_type<tc>, window_params = [{transform_indices = @transform_0, window_bounds = array<i64: 32, 256>}, {transform_indices = @transform_1, window_bounds = array<i64: 32, 256>}]} {
    %c0 = arith.constant 0 : index
    %c0_0 = arith.constant 0 : index
    %0 = vector.load %arg1[%c0, %c0_0] : memref<32x256xf32, #tpu.memory_space<vmem>>, vector<32x256xf32>
    %1 = math.absf %0 : vector<32x256xf32>
    %cst = arith.constant 0.000000e+00 : f32
    %2 = vector.broadcast %cst : f32 to vector<32x256xf32>
    %3 = arith.subf %2, %1 : vector<32x256xf32>
    %4 = math.exp %3 : vector<32x256xf32>
    %cst_1 = arith.constant 1.000000e+00 : f32
    %5 = vector.broadcast %cst_1 : f32 to vector<32x256xf32>
    %6 = arith.addf %5, %4 : vector<32x256xf32>
    %7 = tpu.reciprocal %6 : vector<32x256xf32> -> vector<32x256xf32>
    %cst_2 = arith.constant 0.000000e+00 : f32
    %8 = vector.broadcast %cst_2 : f32 to vector<32x256xf32>
    %9 = arith.cmpf oge, %0, %8 : vector<32x256xf32>
    %10 = arith.mulf %4, %7 : vector<32x256xf32>
    %11 = arith.select %9, %7, %10 : vector<32x256xi1>, vector<32x256xf32>
    %c0_3 = arith.constant 0 : index
    %c0_4 = arith.constant 0 : index
    %12 = vector.load %arg2[%c0_3, %c0_4] : memref<32x256xf32, #tpu.memory_space<vmem>>, vector<32x256xf32>
    tpu.vector_store %arg2[%c0_3, %c0_4], %11 {strides = array<i32>} : memref<32x256xf32, #tpu.memory_space<vmem>>, vector<32x256xf32>,
    return
  }
  func.func @transform_0(%arg0: i32) -> (i32, i32) {
    %c0_i32 = arith.constant 0 : i32
    %c0_i32_0 = arith.constant 0 : i32
    return %arg0, %c0_i32 : i32, i32
  }
  func.func @transform_1(%arg0: i32) -> (i32, i32) {
    %c0_i32 = arith.constant 0 : i32
    %c0_i32_0 = arith.constant 0 : i32
    return %arg0, %c0_i32 : i32, i32
  }
}

</mosaic_0001>

<llo_original>
// kernel: tpu_custom_call.1
$region0: #{tpu_custom_call.1}
  #allocation0 [shape = 'u32[]', space=smem, size = 0x4, offset = 0x4, fixed_abs, tag = 'smem constant byte address 0x4 - core index']
  #allocation1 [shape = 'u32[72,128]{1,0:T(1,128)}', space=vmem, size = 0x9000, scoped, tag = 'internal scratch']
  %s0 = inlined_call_operand.hbm [shape: f32[8,256], index: 0, kind: input, shape index: {}]
  %s1 = inlined_call_operand.hbm [shape: f32[8,256], index: 1, kind: output, shape index: {}]
  %s2 = sld [smem:[#allocation0]]
  $region18: #{tpu_custom_call.1} parent=0
    _
  %s4 = ssub.s32 1, %s2
  %s5 = scalar_select 0, %s4, %s2
  $region1: #{tpu_custom_call.1} parent=0
    #allocation2 [shape = 'u8[32768]{0}', space=vmem, size = 0x8000, scoped, tag = 'input window, operand 0, single buffered']
    #allocation3 [shape = 's32[1]{0}', space=sflag, size = 0x4, scoped, tag = 'scoped memory for tpu_custom_call.1']
    #allocation4 [shape = 's32[1]{0}', space=sflag, size = 0x4, scoped, tag = 'scoped memory for tpu_custom_call.1']
    #allocation5 [shape = 'u8[32768]{0}', space=vmem, size = 0x8000, scoped, tag = 'output window, operand 0, single buffered']
    %6 = vsyncpa [#allocation3], 0
    %7 = vsyncpa [#allocation4], 0
    // Predicated region
    $region2: #{tpu_custom_call.1} parent=1 // pred_check
      _
    $region3: #{tpu_custom_call.1} parent=1 // pred_check_branch
      %9 = sbr.rel (0) target = $region5
    $region4: #{tpu_custom_call.1} parent=1 // pred_region
      %11 = vsyncadd [#allocation3], 768
      %s12 = sshll.u32 %s0, 4
      %s13 = int_to_ptr.hbm [resolvable:$true] %s12
      %s14 = sshll.u32 [#allocation2], 4
      %s15 = int_to_ptr.vmem [resolvable:$true] %s14
      %20 = dma.hbm_to_vmem [thread:$0]  %s13, 256, %s15, [#allocation3], 256, 256, 16
    $region5: #{tpu_custom_call.1} parent=1 // pred_fallthru
      _
    // Predicated region
    $region6: #{tpu_custom_call.1} parent=1 // pred_check
      _
    $region7: #{tpu_custom_call.1} parent=1 // pred_check_branch
      %22 = sbr.rel (0) target = $region9
    $region8: #{tpu_custom_call.1} parent=1 // pred_region
      %24 = dma.done [#allocation3], 1024
    $region9: #{tpu_custom_call.1} parent=1 // pred_fallthru
      _
    %v25 = vld [vmem:[#allocation2] sm:$0xff]
    %v26 = vld [vmem:[#allocation2 + $0x8] sm:$0xff]
    %v27 = vld [vmem:[#allocation2 + $0x10] sm:$0xff]
    %v28 = vld [vmem:[#allocation2 + $0x18] sm:$0xff]
    %v29 = vld [vmem:[#allocation2 + $0x20] sm:$0xff]
    %v30 = vld [vmem:[#allocation2 + $0x28] sm:$0xff]
    %v31 = vld [vmem:[#allocation2 + $0x30] sm:$0xff]
    %v32 = vld [vmem:[#allocation2 + $0x38] sm:$0xff]
    %v33 = vand.u32 2147483647, %v25
    %v34 = vand.u32 2147483647, %v26
    %v35 = vand.u32 2147483647, %v27
    %v36 = vand.u32 2147483647, %v28
    %v37 = vand.u32 2147483647, %v29
    %v38 = vand.u32 2147483647, %v30
    %v39 = vand.u32 2147483647, %v31
    %v40 = vand.u32 2147483647, %v32
    %v41 = vsub.f32 0.0, %v33
    %v42 = vsub.f32 0.0, %v34
    %v43 = vsub.f32 0.0, %v35
    %v44 = vsub.f32 0.0, %v36
    %v45 = vsub.f32 0.0, %v37
    %v46 = vsub.f32 0.0, %v38
    %v47 = vsub.f32 0.0, %v39
    %v48 = vsub.f32 0.0, %v40
    %v49 = vmul.f32 %v41, 1.442695
    %v50 = vpow.pop %v49
    %v51 = vmul.f32 %v42, 1.442695
    %v52 = vpow.pop %v51
    %v53 = vmul.f32 %v43, 1.442695
    %v54 = vpow.pop %v53
    %v55 = vmul.f32 %v44, 1.442695
    %v56 = vpow.pop %v55
    %v57 = vmul.f32 %v45, 1.442695
    %v58 = vpow.pop %v57
    %v59 = vmul.f32 %v46, 1.442695
    %v60 = vpow.pop %v59
    %v61 = vmul.f32 %v47, 1.442695
    %v62 = vpow.pop %v61
    %v63 = vmul.f32 %v48, 1.442695
    %v64 = vpow.pop %v63
    %v65 = vadd.f32 %v50, 1.0
    %v66 = vadd.f32 %v52, 1.0
    %v67 = vadd.f32 %v54, 1.0
    %v68 = vadd.f32 %v56, 1.0
    %v69 = vadd.f32 %v58, 1.0
    %v70 = vadd.f32 %v60, 1.0
    %v71 = vadd.f32 %v62, 1.0
    %v72 = vadd.f32 %v64, 1.0
    %v73 = vrcp.pop %v65
    %v74 = vmul.f32 %v65, %v73
    %v75 = vsub.f32 1.0, %v74
    %v76 = vmul.f32 %v73, %v75
    %v77 = vadd.f32 %v73, %v76
    %vm78 = vweird.f32 %v65
    %vm79 = vweird.f32 %v73
    %vm80 = vmor %vm78, %vm79
    %v81 = vsel %vm80, %v73, %v77
    %v82 = vand.u32 2147483647, %v65
    %vm83 = vcmp.eq.f32.partialorder %v82, 8.507059e+37
    %v84 = vand.u32 %v65, 2147483648
    %v85 = vor.u32 1.1754944e-38, %v84
    %v86 = vsel %vm83, %v85, %v81
    %v87 = vrcp.pop %v66
    %v88 = vmul.f32 %v66, %v87
    %v89 = vsub.f32 1.0, %v88
    %v90 = vmul.f32 %v87, %v89
    %v91 = vadd.f32 %v87, %v90
    %vm92 = vweird.f32 %v66
    %vm93 = vweird.f32 %v87
    %vm94 = vmor %vm92, %vm93
    %v95 = vsel %vm94, %v87, %v91
    %v96 = vand.u32 2147483647, %v66
    %vm97 = vcmp.eq.f32.partialorder %v96, 8.507059e+37
    %v98 = vand.u32 %v66, 2147483648
    %v99 = vor.u32 1.1754944e-38, %v98
    %v100 = vsel %vm97, %v99, %v95
    %v101 = vrcp.pop %v67
    %v102 = vmul.f32 %v67, %v101
    %v103 = vsub.f32 1.0, %v102
    %v104 = vmul.f32 %v101, %v103
    %v105 = vadd.f32 %v101, %v104
    %vm106 = vweird.f32 %v67
    %vm107 = vweird.f32 %v101
    %vm108 = vmor %vm106, %vm107
    %v109 = vsel %vm108, %v101, %v105
    %v110 = vand.u32 2147483647, %v67
    %vm111 = vcmp.eq.f32.partialorder %v110, 8.507059e+37
    %v112 = vand.u32 %v67, 2147483648
    %v113 = vor.u32 1.1754944e-38, %v112
    %v114 = vsel %vm111, %v113, %v109
    %v115 = vrcp.pop %v68
    %v116 = vmul.f32 %v68, %v115
    %v117 = vsub.f32 1.0, %v116
    %v118 = vmul.f32 %v115, %v117
    %v119 = vadd.f32 %v115, %v118
    %vm120 = vweird.f32 %v68
    %vm121 = vweird.f32 %v115
    %vm122 = vmor %vm120, %vm121
    %v123 = vsel %vm122, %v115, %v119
    %v124 = vand.u32 2147483647, %v68
    %vm125 = vcmp.eq.f32.partialorder %v124, 8.507059e+37
    %v126 = vand.u32 %v68, 2147483648
    %v127 = vor.u32 1.1754944e-38, %v126
    %v128 = vsel %vm125, %v127, %v123
    %v129 = vrcp.pop %v69
    %v130 = vmul.f32 %v69, %v129
    %v131 = vsub.f32 1.0, %v130
    %v132 = vmul.f32 %v129, %v131
    %v133 = vadd.f32 %v129, %v132
    %vm134 = vweird.f32 %v69
    %vm135 = vweird.f32 %v129
    %vm136 = vmor %vm134, %vm135
    %v137 = vsel %vm136, %v129, %v133
    %v138 = vand.u32 2147483647, %v69
    %vm139 = vcmp.eq.f32.partialorder %v138, 8.507059e+37
    %v140 = vand.u32 %v69, 2147483648
    %v141 = vor.u32 1.1754944e-38, %v140
    %v142 = vsel %vm139, %v141, %v137
    %v143 = vrcp.pop %v70
    %v144 = vmul.f32 %v70, %v143
    %v145 = vsub.f32 1.0, %v144
    %v146 = vmul.f32 %v143, %v145
    %v147 = vadd.f32 %v143, %v146
    %vm148 = vweird.f32 %v70
    %vm149 = vweird.f32 %v143
    %vm150 = vmor %vm148, %vm149
    %v151 = vsel %vm150, %v143, %v147
    %v152 = vand.u32 2147483647, %v70
    %vm153 = vcmp.eq.f32.partialorder %v152, 8.507059e+37
    %v154 = vand.u32 %v70, 2147483648
    %v155 = vor.u32 1.1754944e-38, %v154
    %v156 = vsel %vm153, %v155, %v151
    %v157 = vrcp.pop %v71
    %v158 = vmul.f32 %v71, %v157
    %v159 = vsub.f32 1.0, %v158
    %v160 = vmul.f32 %v157, %v159
    %v161 = vadd.f32 %v157, %v160
    %vm162 = vweird.f32 %v71
    %vm163 = vweird.f32 %v157
    %vm164 = vmor %vm162, %vm163
    %v165 = vsel %vm164, %v157, %v161
    %v166 = vand.u32 2147483647, %v71
    %vm167 = vcmp.eq.f32.partialorder %v166, 8.507059e+37
    %v168 = vand.u32 %v71, 2147483648
    %v169 = vor.u32 1.1754944e-38, %v168
    %v170 = vsel %vm167, %v169, %v165
    %v171 = vrcp.pop %v72
    %v172 = vmul.f32 %v72, %v171
    %v173 = vsub.f32 1.0, %v172
    %v174 = vmul.f32 %v171, %v173
    %v175 = vadd.f32 %v171, %v174
    %vm176 = vweird.f32 %v72
    %vm177 = vweird.f32 %v171
    %vm178 = vmor %vm176, %vm177
    %v179 = vsel %vm178, %v171, %v175
    %v180 = vand.u32 2147483647, %v72
    %vm181 = vcmp.eq.f32.partialorder %v180, 8.507059e+37
    %v182 = vand.u32 %v72, 2147483648
    %v183 = vor.u32 1.1754944e-38, %v182
    %v184 = vsel %vm181, %v183, %v179
    %vm185 = vcmp.ge.f32.partialorder %v25, 0.0
    %vm186 = vcmp.ge.f32.partialorder %v26, 0.0
    %vm187 = vcmp.ge.f32.partialorder %v27, 0.0
    %vm188 = vcmp.ge.f32.partialorder %v28, 0.0
    %vm189 = vcmp.ge.f32.partialorder %v29, 0.0
    %vm190 = vcmp.ge.f32.partialorder %v30, 0.0
    %vm191 = vcmp.ge.f32.partialorder %v31, 0.0
    %vm192 = vcmp.ge.f32.partialorder %v32, 0.0
    %v193 = vmul.f32 %v50, %v86
    %v194 = vmul.f32 %v52, %v100
    %v195 = vmul.f32 %v54, %v114
    %v196 = vmul.f32 %v56, %v128
    %v197 = vmul.f32 %v58, %v142
    %v198 = vmul.f32 %v60, %v156
    %v199 = vmul.f32 %v62, %v170
    %v200 = vmul.f32 %v64, %v184
    %v201 = vsel %vm185, %v86, %v193
    %v202 = vsel %vm186, %v100, %v194
    %v203 = vsel %vm187, %v114, %v195
    %v204 = vsel %vm188, %v128, %v196
    %v205 = vsel %vm189, %v142, %v197
    %v206 = vsel %vm190, %v156, %v198
    %v207 = vsel %vm191, %v170, %v199
    %v208 = vsel %vm192, %v184, %v200
    %209 = vst [vmem:[#allocation5] sm:$0xff] %v201
    %210 = vst [vmem:[#allocation5 + $0x8] sm:$0xff] %v202
    %211 = vst [vmem:[#allocation5 + $0x10] sm:$0xff] %v203
    %212 = vst [vmem:[#allocation5 + $0x18] sm:$0xff] %v204
    %213 = vst [vmem:[#allocation5 + $0x20] sm:$0xff] %v205
    %214 = vst [vmem:[#allocation5 + $0x28] sm:$0xff] %v206
    %215 = vst [vmem:[#allocation5 + $0x30] sm:$0xff] %v207
    %216 = vst [vmem:[#allocation5 + $0x38] sm:$0xff] %v208
    // Predicated region
    $region10: #{tpu_custom_call.1} parent=1 // pred_check
      _
    $region11: #{tpu_custom_call.1} parent=1 // pred_check_branch
      %218 = sbr.rel (0) target = $region13
    $region12: #{tpu_custom_call.1} parent=1 // pred_region
      %220 = vsyncadd [#allocation4], 768
      %s221 = sshll.u32 [#allocation5], 4
      %s222 = int_to_ptr.vmem [resolvable:$true] %s221
      %s223 = sshll.u32 %s1, 4
      %s224 = int_to_ptr.hbm [resolvable:$true] %s223
      %229 = dma.vmem_to_hbm [thread:$0]  %s222, 256, %s224, [#allocation4], 256, 256, 16
    $region13: #{tpu_custom_call.1} parent=1 // pred_fallthru
      _
    // Predicated region
    $region14: #{tpu_custom_call.1} parent=1 // pred_check
      _
    $region15: #{tpu_custom_call.1} parent=1 // pred_check_branch
      %231 = sbr.rel (0) target = $region17
    $region16: #{tpu_custom_call.1} parent=1 // pred_region
      %233 = dma.done [#allocation4], 1024
    $region17: #{tpu_custom_call.1} parent=1 // pred_fallthru
      _
    %234 = vsyncpa [#allocation3], 1
    %235 = vsyncpa [#allocation4], 1

</llo_original>
